<compile_context>
chip_gen: v6e
topology: v6e:2x2x1
jax: 0.10.0
libtpu: 0.0.40
codegen_flags: <defaults>
</compile_context>

<pallas_src>
import jax
import jax.numpy as jnp
from jax.experimental import pallas as pl
from jax.experimental.pallas import tpu as pltpu

BN_EPS = 1e-5


def embedding_neck_kernel(x_ref, w_ref, gb_ref, o_ref, acc_ref):
    """Grid: (j over Dout tiles [parallel], k over Din tiles [arbitrary])."""
    k = pl.program_id(1)

    @pl.when(k == 0)
    def _init():
        acc_ref[...] = jnp.zeros_like(acc_ref)

    # Linear (no bias — cancelled by training-mode BN): accumulate x @ W in f32.
    acc_ref[...] += jnp.dot(x_ref[...], w_ref[...],
                            preferred_element_type=jnp.float32)

    @pl.when(k == pl.num_programs(1) - 1)
    def _finalize():
        y = acc_ref[...]                                    # (B, TN) f32

        # BatchNorm1d (training): per-feature batch stats, biased variance.
        # var = E[y^2] - mean^2 (one fewer full-tile VPU pass than centering).
        mean = jnp.mean(y, axis=0, keepdims=True)
        var = jnp.maximum(jnp.mean(y * y, axis=0, keepdims=True) - mean * mean, 0.0)

        # Fold BN affine into one FMA:  o = max(y*scale + shift, 0)
        gb = gb_ref[...].astype(jnp.float32)                # (2, TN): gamma / beta
        scale = gb[0:1, :] * jax.lax.rsqrt(var + BN_EPS)
        shift = gb[1:2, :] - mean * scale

        o_ref[...] = jnp.maximum(y * scale + shift, 0.0).astype(o_ref.dtype)


def _tile_vmem_bytes(B, tk, tn, in_item, w_item, out_item, x_bufs):
    """Approximate per-step VMEM footprint for the chosen tiles."""
    return (x_bufs * B * tk * in_item      # x block(s)
            + 2 * tk * tn * w_item         # double-buffered weight tile
            + 2 * 2 * tn * 4               # packed gamma/beta tile (double-buffered)
            + 2 * B * tn * out_item        # output tile (double-buffered)
            + B * tn * 4                   # f32 accumulator scratch
            + 2 * B * tn * 4)              # f32 intermediates (scale/shift math)


def _select_tiles(B, Din, Dout, in_item, w_item, out_item, vmem_cap):
    """Pick (tk, tn): lane-dense divisors, prefer >=2 feature steps (v7x TCs)."""
    budget = int(0.45 * vmem_cap)          # headroom for compiler scratch etc.

    tk_cands = [Din] + sorted(
        [c for c in range(128, Din, 128) if Din % c == 0], reverse=True)
    tn_cands = sorted(
        [c for c in range(128, Dout + 1, 128) if Dout % c == 0], reverse=True) or [Dout]

    for tk in tk_cands:
        x_bufs = 1 if tk == Din else 2
        fitting = [tn for tn in tn_cands
                   if _tile_vmem_bytes(B, tk, tn, in_item, w_item, out_item, x_bufs) <= budget]
        if not fitting:
            continue
        multi = [tn for tn in fitting if Dout // tn >= 2]
        return tk, (max(multi) if multi else max(fitting))

    # Nothing fits the soft budget: take the smallest tiles and let the
    # compiler surface a hard VMEM error if it truly cannot fit.
    return tk_cands[-1], tn_cands[-1]


def embedding_neck(x, w, gamma, beta, *, tn=None, tk=None, matmul_dtype=None):
    """x: (B, Din); w: (Din, Dout); gamma/beta: (Dout,). Returns (B, Dout).

    Equivalent to nn.Linear -> nn.BatchNorm1d (training mode) -> ReLU.
    The Linear bias is omitted because BN mean-subtraction cancels it exactly.
    matmul_dtype: optional lower-precision dtype (e.g. jnp.bfloat16) for the
    matmul operands; accumulation stays f32 and the output keeps x.dtype.
    """
    B, Din = x.shape
    Dout = w.shape[1]
    out_dtype = x.dtype

    if matmul_dtype is not None:
        x = x.astype(matmul_dtype)
        w = w.astype(matmul_dtype)

    in_item = jnp.dtype(x.dtype).itemsize
    w_item = jnp.dtype(w.dtype).itemsize
    out_item = jnp.dtype(out_dtype).itemsize

    # Physical VMEM per core (v7x: 64 MiB, v5e/v6e: 128 MiB); conservative fallback.
    try:
        vmem_cap = int(pltpu.get_tpu_info().vmem_capacity_bytes)
    except Exception:
        vmem_cap = 64 * 1024 * 1024

    auto_tk, auto_tn = _select_tiles(B, Din, Dout, in_item, w_item, out_item, vmem_cap)
    tk = auto_tk if tk is None else tk
    tn = auto_tn if tn is None else tn
    assert Din % tk == 0, f"tk={tk} must divide Din={Din}"
    assert Dout % tn == 0, f"tn={tn} must divide Dout={Dout}"
    grid_j = Dout // tn
    grid_k = Din // tk

    gb = jnp.stack([gamma, beta], axis=0)      # (2, Dout) — one DMA instead of two

    x_bufs = 1 if grid_k == 1 else 2
    tile_bytes = _tile_vmem_bytes(B, tk, tn, in_item, w_item, out_item, x_bufs)
    vmem_limit = int(min(max(4 * 1024 * 1024, 2 * tile_bytes), int(0.9 * vmem_cap)))

    cost = pl.CostEstimate(
        flops=2 * B * Din * Dout,
        transcendentals=Dout,                  # one rsqrt per output feature
        bytes_accessed=(x.size * in_item + w.size * w_item
                        + gb.size * jnp.dtype(gb.dtype).itemsize
                        + B * Dout * out_item),
    )

    def _build(single_buffer_x):
        if single_buffer_x:
            # x's block index never changes when grid_k == 1; a second buffer
            # would only waste VMEM.
            x_spec = pl.BlockSpec((B, tk), lambda j, k: (0, k),
                                  pipeline_mode=pl.Buffered(1))
        else:
            x_spec = pl.BlockSpec((B, tk), lambda j, k: (0, k))

        return pl.pallas_call(
            embedding_neck_kernel,
            out_shape=jax.ShapeDtypeStruct((B, Dout), out_dtype),
            grid_spec=pltpu.PrefetchScalarGridSpec(
                num_scalar_prefetch=0,
                grid=(grid_j, grid_k),
                in_specs=[
                    x_spec,                                          # x tile
                    pl.BlockSpec((tk, tn), lambda j, k: (k, j)),     # weight tile
                    pl.BlockSpec((2, tn), lambda j, k: (0, j)),      # gamma/beta tile
                ],
                out_specs=pl.BlockSpec((B, tn), lambda j, k: (0, j)),
                scratch_shapes=[pltpu.VMEM((B, tn), jnp.float32)],   # f32 accumulator
            ),
            compiler_params=pltpu.CompilerParams(
                # feature tiles shard across v7x's 2 TCs; K is a reduction axis.
                dimension_semantics=("parallel", "arbitrary"),
                vmem_limit_bytes=vmem_limit,
            ),
            cost_estimate=cost,
        )

    if grid_k == 1:
        try:
            return _build(single_buffer_x=True)(x, w, gb)
        except Exception:
            pass  # pipeline_mode / Buffered(1) unsupported — fall back to default
    return _build(single_buffer_x=False)(x, w, gb)


def reference(x, w, b, gamma, beta):
    # Faithful PyTorch-style reference WITH the Linear bias, demonstrating that
    # dropping it in the kernel is a semantic no-op under training-mode BN.
    y = x.astype(jnp.float32) @ w.astype(jnp.float32) + b
    mean = jnp.mean(y, axis=0, keepdims=True)
    var = jnp.mean((y - mean) ** 2, axis=0, keepdims=True)
    y = (y - mean) / jnp.sqrt(var + BN_EPS)
    y = y * gamma + beta
    return jnp.maximum(y, 0.0)


if __name__ == "__main__":
    B, IN_FEATURES, OUT_FEATURES = 8, 32, 128

    key = jax.random.PRNGKey(0)
    kx, kw, kb = jax.random.split(key, 3)

    # Deterministic parameter init (mirrors PyTorch defaults):
    #   Linear: U(-1/sqrt(in), 1/sqrt(in)) for weight and bias.
    #   BatchNorm1d: gamma = 1, beta = 0.
    bound = 1.0 / (IN_FEATURES ** 0.5)
    w = jax.random.uniform(kw, (IN_FEATURES, OUT_FEATURES), jnp.float32, -bound, bound)
    b = jax.random.uniform(kb, (OUT_FEATURES,), jnp.float32, -bound, bound)
    gamma = jnp.ones((OUT_FEATURES,), jnp.float32)
    beta = jnp.zeros((OUT_FEATURES,), jnp.float32)

    x = jax.random.normal(kx, (B, IN_FEATURES), jnp.float32)

    ref = reference(x, w, b, gamma, beta)

    # Exact-precision path (f32 operands, f32 accumulation).
    out_f32 = jax.block_until_ready(embedding_neck(x, w, gamma, beta))
    assert out_f32.shape == (B, OUT_FEATURES)
    assert jnp.allclose(out_f32, ref, atol=1e-4, rtol=1e-4)

    # bf16-operand path (the recommended perf configuration): looser tolerance.
    out_bf16 = jax.block_until_ready(
        embedding_neck(x, w, gamma, beta, matmul_dtype=jnp.bfloat16))
    assert out_bf16.shape == (B, OUT_FEATURES)
    assert float(jnp.max(jnp.abs(out_bf16.astype(jnp.float32) - ref))) < 0.1

    print("KERNEL_OK")
</pallas_src>

<mosaic_0001>
module attributes {stable_mosaic.version = 11 : i64} {
  func.func @embedding_neck_kernel(%arg0: i32, %arg1: i32, %arg2: memref<8x32xf32, #tpu.memory_space<vmem>>, %arg3: memref<32x128xf32, #tpu.memory_space<vmem>>, %arg4: memref<2x128xf32, #tpu.memory_space<vmem>>, %arg5: memref<8x128xf32, #tpu.memory_space<vmem>>, %arg6: memref<8x128xf32, #tpu.memory_space<vmem>>) attributes {dimension_semantics = [#tpu.dimension_semantics<parallel>, #tpu.dimension_semantics<arbitrary>], iteration_bounds = array<i64: 1, 1>, scalar_prefetch = 0 : i64, scratch_operands = 1 : i64, tpu.core_type = #tpu.core_type<tc>, window_params = [{pipeline_mode = #tpu.pipeline_mode<synchronous>, transform_indices = @transform_0, window_bounds = array<i64: 8, 32>}, {transform_indices = @transform_1, window_bounds = array<i64: 32, 128>}, {transform_indices = @transform_2, window_bounds = array<i64: 2, 128>}, {transform_indices = @transform_3, window_bounds = array<i64: 8, 128>}]} {
    %c0_i32 = arith.constant 0 : i32
    %0 = arith.cmpi eq, %arg1, %c0_i32 : i32
    %1 = arith.extui %0 : i1 to i32
    %c0_i32_0 = arith.constant 0 : i32
    %2 = arith.cmpi ne, %1, %c0_i32_0 : i32
    scf.if %2 {
      %cst_10 = arith.constant 0.000000e+00 : f32
      %12 = vector.broadcast %cst_10 : f32 to vector<8x128xf32>
      %c0_11 = arith.constant 0 : index
      %c0_12 = arith.constant 0 : index
      %13 = vector.load %arg6[%c0_11, %c0_12] : memref<8x128xf32, #tpu.memory_space<vmem>>, vector<8x128xf32>
      tpu.vector_store %arg6[%c0_11, %c0_12], %12 {strides = array<i32>} : memref<8x128xf32, #tpu.memory_space<vmem>>, vector<8x128xf32>,
    } else {
    }
    %c0 = arith.constant 0 : index
    %c0_1 = arith.constant 0 : index
    %3 = vector.load %arg6[%c0, %c0_1] : memref<8x128xf32, #tpu.memory_space<vmem>>, vector<8x128xf32>
    %c0_2 = arith.constant 0 : index
    %c0_3 = arith.constant 0 : index
    %4 = vector.load %arg2[%c0_2, %c0_3] : memref<8x32xf32, #tpu.memory_space<vmem>>, vector<8x32xf32>
    %c0_4 = arith.constant 0 : index
    %c0_5 = arith.constant 0 : index
    %5 = vector.load %arg3[%c0_4, %c0_5] : memref<32x128xf32, #tpu.memory_space<vmem>>, vector<32x128xf32>
    %cst = arith.constant dense<0.000000e+00> : vector<8x128xf32>
    %6 = tpu.matmul %4, %5, %cst {dimension_numbers = #tpu.dot_dimension_numbers<[1], [0], [0], [1], [0, 0, 1, 1], [], []>} : vector<8x32xf32>, vector<32x128xf32>, vector<8x128xf32> -> vector<8x128xf32>
    %7 = arith.addf %3, %6 : vector<8x128xf32>
    %c0_6 = arith.constant 0 : index
    %c0_7 = arith.constant 0 : index
    %8 = vector.load %arg6[%c0_6, %c0_7] : memref<8x128xf32, #tpu.memory_space<vmem>>, vector<8x128xf32>
    tpu.vector_store %arg6[%c0_6, %c0_7], %7 {strides = array<i32>} : memref<8x128xf32, #tpu.memory_space<vmem>>, vector<8x128xf32>,
    %c0_i32_8 = arith.constant 0 : i32
    %9 = arith.cmpi eq, %arg1, %c0_i32_8 : i32
    %10 = arith.extui %9 : i1 to i32
    %c0_i32_9 = arith.constant 0 : i32
    %11 = arith.cmpi ne, %10, %c0_i32_9 : i32
    scf.if %11 {
      %c0_10 = arith.constant 0 : index
      %c0_11 = arith.constant 0 : index
      %12 = vector.load %arg6[%c0_10, %c0_11] : memref<8x128xf32, #tpu.memory_space<vmem>>, vector<8x128xf32>
      %cst_12 = arith.constant dense<0.000000e+00> : vector<128xf32>
      %13 = vector.multi_reduction <add>, %12, %cst_12 [0] : vector<8x128xf32> to vector<128xf32>
      %14 = vector.shape_cast %13 : vector<128xf32> to vector<1x128xf32>
      %cst_13 = arith.constant 8.000000e+00 : f32
      %15 = vector.broadcast %cst_13 : f32 to vector<1x128xf32>
      %16 = arith.divf %14, %15 : vector<1x128xf32>
      %17 = arith.mulf %12, %12 : vector<8x128xf32>
      %cst_14 = arith.constant dense<0.000000e+00> : vector<128xf32>
      %18 = vector.multi_reduction <add>, %17, %cst_14 [0] : vector<8x128xf32> to vector<128xf32>
      %19 = vector.shape_cast %18 : vector<128xf32> to vector<1x128xf32>
      %cst_15 = arith.constant 8.000000e+00 : f32
      %20 = vector.broadcast %cst_15 : f32 to vector<1x128xf32>
      %21 = arith.divf %19, %20 : vector<1x128xf32>
      %22 = arith.mulf %16, %16 : vector<1x128xf32>
      %23 = arith.subf %21, %22 : vector<1x128xf32>
      %cst_16 = arith.constant 0.000000e+00 : f32
      %24 = vector.broadcast %cst_16 : f32 to vector<1x128xf32>
      %25 = arith.maximumf %23, %24 : vector<1x128xf32>
      %c0_17 = arith.constant 0 : index
      %c0_18 = arith.constant 0 : index
      %26 = vector.load %arg4[%c0_17, %c0_18] : memref<2x128xf32, #tpu.memory_space<vmem>>, vector<2x128xf32>
      %27 = vector.extract_strided_slice %26 {offsets = [0, 0], sizes = [1, 128], strides = [1, 1]} : vector<2x128xf32> to vector<1x128xf32>
      %cst_19 = arith.constant 9.99999974E-6 : f32
      %28 = vector.broadcast %cst_19 : f32 to vector<1x128xf32>
      %29 = arith.addf %25, %28 : vector<1x128xf32>
      %30 = math.rsqrt %29 : vector<1x128xf32>
      %31 = arith.mulf %27, %30 : vector<1x128xf32>
      %32 = vector.extract_strided_slice %26 {offsets = [1, 0], sizes = [1, 128], strides = [1, 1]} : vector<2x128xf32> to vector<1x128xf32>
      %33 = arith.mulf %16, %31 : vector<1x128xf32>
      %34 = arith.subf %32, %33 : vector<1x128xf32>
      %35 = vector.broadcast %31 : vector<1x128xf32> to vector<8x128xf32>
      %36 = arith.mulf %12, %35 : vector<8x128xf32>
      %37 = vector.broadcast %34 : vector<1x128xf32> to vector<8x128xf32>
      %38 = arith.addf %36, %37 : vector<8x128xf32>
      %cst_20 = arith.constant 0.000000e+00 : f32
      %39 = vector.broadcast %cst_20 : f32 to vector<8x128xf32>
      %40 = arith.maximumf %38, %39 : vector<8x128xf32>
      %c0_21 = arith.constant 0 : index
      %c0_22 = arith.constant 0 : index
      %41 = vector.load %arg5[%c0_21, %c0_22] : memref<8x128xf32, #tpu.memory_space<vmem>>, vector<8x128xf32>
      tpu.vector_store %arg5[%c0_21, %c0_22], %40 {strides = array<i32>} : memref<8x128xf32, #tpu.memory_space<vmem>>, vector<8x128xf32>,
    } else {
    }
    return
  }
  func.func @transform_0(%arg0: i32, %arg1: i32) -> (i32, i32) {
    %c0_i32 = arith.constant 0 : i32
    %c0_i32_0 = arith.constant 0 : i32
    return %c0_i32, %arg1 : i32, i32
  }
  func.func @transform_1(%arg0: i32, %arg1: i32) -> (i32, i32) {
    %c0_i32 = arith.constant 0 : i32
    return %arg1, %arg0 : i32, i32
  }
  func.func @transform_2(%arg0: i32, %arg1: i32) -> (i32, i32) {
    %c0_i32 = arith.constant 0 : i32
    %c0_i32_0 = arith.constant 0 : i32
    return %c0_i32, %arg0 : i32, i32
  }
  func.func @transform_3(%arg0: i32, %arg1: i32) -> (i32, i32) {
    %c0_i32 = arith.constant 0 : i32
    %c0_i32_0 = arith.constant 0 : i32
    return %c0_i32, %arg0 : i32, i32
  }
}

module attributes {stable_mosaic.version = 11 : i64} {
  func.func @embedding_neck_kernel(%arg0: i32, %arg1: i32, %arg2: memref<8x32xf32, #tpu.memory_space<vmem>>, %arg3: memref<32x128xf32, #tpu.memory_space<vmem>>, %arg4: memref<2x128xf32, #tpu.memory_space<vmem>>, %arg5: memref<8x128xf32, #tpu.memory_space<vmem>>, %arg6: memref<8x128xf32, #tpu.memory_space<vmem>>) attributes {dimension_semantics = [#tpu.dimension_semantics<parallel>, #tpu.dimension_semantics<arbitrary>], iteration_bounds = array<i64: 1, 1>, scalar_prefetch = 0 : i64, scratch_operands = 1 : i64, tpu.core_type = #tpu.core_type<tc>, window_params = [{transform_indices = @transform_0, window_bounds = array<i64: 8, 32>}, {transform_indices = @transform_1, window_bounds = array<i64: 32, 128>}, {transform_indices = @transform_2, window_bounds = array<i64: 2, 128>}, {transform_indices = @transform_3, window_bounds = array<i64: 8, 128>}]} {
    %c0_i32 = arith.constant 0 : i32
    %0 = arith.cmpi eq, %arg1, %c0_i32 : i32
    %1 = arith.extui %0 : i1 to i32
    %c0_i32_0 = arith.constant 0 : i32
    %2 = arith.cmpi ne, %1, %c0_i32_0 : i32
    scf.if %2 {
      %cst_10 = arith.constant 0.000000e+00 : f32
      %12 = vector.broadcast %cst_10 : f32 to vector<8x128xf32>
      %c0_11 = arith.constant 0 : index
      %c0_12 = arith.constant 0 : index
      %13 = vector.load %arg6[%c0_11, %c0_12] : memref<8x128xf32, #tpu.memory_space<vmem>>, vector<8x128xf32>
      tpu.vector_store %arg6[%c0_11, %c0_12], %12 {strides = array<i32>} : memref<8x128xf32, #tpu.memory_space<vmem>>, vector<8x128xf32>,
    } else {
    }
    %c0 = arith.constant 0 : index
    %c0_1 = arith.constant 0 : index
    %3 = vector.load %arg6[%c0, %c0_1] : memref<8x128xf32, #tpu.memory_space<vmem>>, vector<8x128xf32>
    %c0_2 = arith.constant 0 : index
    %c0_3 = arith.constant 0 : index
    %4 = vector.load %arg2[%c0_2, %c0_3] : memref<8x32xf32, #tpu.memory_space<vmem>>, vector<8x32xf32>
    %c0_4 = arith.constant 0 : index
    %c0_5 = arith.constant 0 : index
    %5 = vector.load %arg3[%c0_4, %c0_5] : memref<32x128xf32, #tpu.memory_space<vmem>>, vector<32x128xf32>
    %cst = arith.constant dense<0.000000e+00> : vector<8x128xf32>
    %6 = tpu.matmul %4, %5, %cst {dimension_numbers = #tpu.dot_dimension_numbers<[1], [0], [0], [1], [0, 0, 1, 1], [], []>} : vector<8x32xf32>, vector<32x128xf32>, vector<8x128xf32> -> vector<8x128xf32>
    %7 = arith.addf %3, %6 : vector<8x128xf32>
    %c0_6 = arith.constant 0 : index
    %c0_7 = arith.constant 0 : index
    %8 = vector.load %arg6[%c0_6, %c0_7] : memref<8x128xf32, #tpu.memory_space<vmem>>, vector<8x128xf32>
    tpu.vector_store %arg6[%c0_6, %c0_7], %7 {strides = array<i32>} : memref<8x128xf32, #tpu.memory_space<vmem>>, vector<8x128xf32>,
    %c0_i32_8 = arith.constant 0 : i32
    %9 = arith.cmpi eq, %arg1, %c0_i32_8 : i32
    %10 = arith.extui %9 : i1 to i32
    %c0_i32_9 = arith.constant 0 : i32
    %11 = arith.cmpi ne, %10, %c0_i32_9 : i32
    scf.if %11 {
      %c0_10 = arith.constant 0 : index
      %c0_11 = arith.constant 0 : index
      %12 = vector.load %arg6[%c0_10, %c0_11] : memref<8x128xf32, #tpu.memory_space<vmem>>, vector<8x128xf32>
      %cst_12 = arith.constant dense<0.000000e+00> : vector<128xf32>
      %13 = vector.multi_reduction <add>, %12, %cst_12 [0] : vector<8x128xf32> to vector<128xf32>
      %14 = vector.shape_cast %13 : vector<128xf32> to vector<1x128xf32>
      %cst_13 = arith.constant 8.000000e+00 : f32
      %15 = vector.broadcast %cst_13 : f32 to vector<1x128xf32>
      %16 = arith.divf %14, %15 : vector<1x128xf32>
      %17 = arith.mulf %12, %12 : vector<8x128xf32>
      %cst_14 = arith.constant dense<0.000000e+00> : vector<128xf32>
      %18 = vector.multi_reduction <add>, %17, %cst_14 [0] : vector<8x128xf32> to vector<128xf32>
      %19 = vector.shape_cast %18 : vector<128xf32> to vector<1x128xf32>
      %cst_15 = arith.constant 8.000000e+00 : f32
      %20 = vector.broadcast %cst_15 : f32 to vector<1x128xf32>
      %21 = arith.divf %19, %20 : vector<1x128xf32>
      %22 = arith.mulf %16, %16 : vector<1x128xf32>
      %23 = arith.subf %21, %22 : vector<1x128xf32>
      %cst_16 = arith.constant 0.000000e+00 : f32
      %24 = vector.broadcast %cst_16 : f32 to vector<1x128xf32>
      %25 = arith.maximumf %23, %24 : vector<1x128xf32>
      %c0_17 = arith.constant 0 : index
      %c0_18 = arith.constant 0 : index
      %26 = vector.load %arg4[%c0_17, %c0_18] : memref<2x128xf32, #tpu.memory_space<vmem>>, vector<2x128xf32>
      %27 = vector.extract_strided_slice %26 {offsets = [0, 0], sizes = [1, 128], strides = [1, 1]} : vector<2x128xf32> to vector<1x128xf32>
      %cst_19 = arith.constant 9.99999974E-6 : f32
      %28 = vector.broadcast %cst_19 : f32 to vector<1x128xf32>
      %29 = arith.addf %25, %28 : vector<1x128xf32>
      %30 = math.rsqrt %29 : vector<1x128xf32>
      %31 = arith.mulf %27, %30 : vector<1x128xf32>
      %32 = vector.extract_strided_slice %26 {offsets = [1, 0], sizes = [1, 128], strides = [1, 1]} : vector<2x128xf32> to vector<1x128xf32>
      %33 = arith.mulf %16, %31 : vector<1x128xf32>
      %34 = arith.subf %32, %33 : vector<1x128xf32>
      %35 = vector.broadcast %31 : vector<1x128xf32> to vector<8x128xf32>
      %36 = arith.mulf %12, %35 : vector<8x128xf32>
      %37 = vector.broadcast %34 : vector<1x128xf32> to vector<8x128xf32>
      %38 = arith.addf %36, %37 : vector<8x128xf32>
      %cst_20 = arith.constant 0.000000e+00 : f32
      %39 = vector.broadcast %cst_20 : f32 to vector<8x128xf32>
      %40 = arith.maximumf %38, %39 : vector<8x128xf32>
      %c0_21 = arith.constant 0 : index
      %c0_22 = arith.constant 0 : index
      %41 = vector.load %arg5[%c0_21, %c0_22] : memref<8x128xf32, #tpu.memory_space<vmem>>, vector<8x128xf32>
      tpu.vector_store %arg5[%c0_21, %c0_22], %40 {strides = array<i32>} : memref<8x128xf32, #tpu.memory_space<vmem>>, vector<8x128xf32>,
    } else {
    }
    return
  }
  func.func @transform_0(%arg0: i32, %arg1: i32) -> (i32, i32) {
    %c0_i32 = arith.constant 0 : i32
    %c0_i32_0 = arith.constant 0 : i32
    return %c0_i32, %arg1 : i32, i32
  }
  func.func @transform_1(%arg0: i32, %arg1: i32) -> (i32, i32) {
    %c0_i32 = arith.constant 0 : i32
    return %arg1, %arg0 : i32, i32
  }
  func.func @transform_2(%arg0: i32, %arg1: i32) -> (i32, i32) {
    %c0_i32 = arith.constant 0 : i32
    %c0_i32_0 = arith.constant 0 : i32
    return %c0_i32, %arg0 : i32, i32
  }
  func.func @transform_3(%arg0: i32, %arg1: i32) -> (i32, i32) {
    %c0_i32 = arith.constant 0 : i32
    %c0_i32_0 = arith.constant 0 : i32
    return %c0_i32, %arg0 : i32, i32
  }
}

</mosaic_0001>

<llo_original>
// kernel: tpu_custom_call.1
$region0: #{tpu_custom_call.1}
  #allocation0 [shape = 'u32[]', space=smem, size = 0x4, offset = 0x4, fixed_abs, tag = 'smem constant byte address 0x4 - core index']
  #allocation1 [shape = 'u32[144,128]{1,0:T(1,128)}', space=vmem, size = 0x12000, scoped, tag = 'internal scratch']
  #allocation2 [shape = 'f32[8,128]{1,0:T(8,128)}', space=vmem, size = 0x1000, scoped, tag = 'scratch operand']
  %s0 = inlined_call_operand.hbm [shape: f32[8,32], index: 0, kind: input, shape index: {}]
  %s1 = inlined_call_operand.hbm [shape: f32[32,128], index: 1, kind: input, shape index: {}]
  %s2 = inlined_call_operand.vmem [shape: f32[2,128], index: 2, kind: input, shape index: {}]
  %s3 = inlined_call_operand.hbm [shape: f32[8,128], index: 3, kind: output, shape index: {}]
  %s4 = sld [smem:[#allocation0]]
  $region38: #{tpu_custom_call.1} parent=0
    _
  %s6 = ssub.s32 1, %s4
  %s7 = scalar_select 0, %s6, %s4
  $region1: #{tpu_custom_call.1} parent=0
    #allocation3 [shape = 'u8[4096]{0}', space=vmem, size = 0x1000, scoped, tag = 'input window, operand 0, single buffered']
    #allocation4 [shape = 's32[1]{0}', space=sflag, size = 0x4, scoped, tag = 'scoped memory for tpu_custom_call.1']
    #allocation5 [shape = 's32[1]{0}', space=sflag, size = 0x4, scoped, tag = 'scoped memory for tpu_custom_call.1']
    #allocation6 [shape = 'u8[16384]{0}', space=vmem, size = 0x4000, scoped, tag = 'input window, operand 1, single buffered']
    #allocation7 [shape = 's32[1]{0}', space=sflag, size = 0x4, scoped, tag = 'scoped memory for tpu_custom_call.1']
    #allocation8 [shape = 'u8[4096]{0}', space=vmem, size = 0x1000, scoped, tag = 'output window, operand 0, single buffered']
    %8 = vsyncpa [#allocation4], 0
    %9 = vsyncpa [#allocation7], 0
    %10 = vsyncpa [#allocation5], 0
    // Predicated region
    $region2: #{tpu_custom_call.1} parent=1 // pred_check
      _
    $region3: #{tpu_custom_call.1} parent=1 // pred_check_branch
      %12 = sbr.rel (0) target = $region5
    $region4: #{tpu_custom_call.1} parent=1 // pred_region
      %s14 = ssub.s32 128, 128
      %15 = vsyncadd [#allocation4], %s14
      %s17 = sshll.u32 [#allocation3], 4
      %s18 = int_to_ptr.vmem [resolvable:$true] %s17
      %20 = dma.hbm_to_vmem [thread:$0]  %s0, 128, %s18, [#allocation4]
    $region5: #{tpu_custom_call.1} parent=1 // pred_fallthru
      _
    // Predicated region
    $region6: #{tpu_custom_call.1} parent=1 // pred_check
      _
    $region7: #{tpu_custom_call.1} parent=1 // pred_check_branch
      %22 = sbr.rel (0) target = $region9
    $region8: #{tpu_custom_call.1} parent=1 // pred_region
      %s24 = ssub.s32 512, 512
      %25 = vsyncadd [#allocation7], %s24
      %s26 = sshll.u32 [#allocation6], 4
      %s27 = int_to_ptr.vmem [resolvable:$true] %s26
      %32 = dma.hbm_to_vmem [thread:$0]  %s1, 512, %s27, [#allocation7], 128, 128, 8
    $region9: #{tpu_custom_call.1} parent=1 // pred_fallthru
      _
    // Predicated region
    $region10: #{tpu_custom_call.1} parent=1 // pred_check
      _
    $region11: #{tpu_custom_call.1} parent=1 // pred_check_branch
      %34 = sbr.rel (0) target = $region13
    $region12: #{tpu_custom_call.1} parent=1 // pred_region
      _
    $region13: #{tpu_custom_call.1} parent=1 // pred_fallthru
      _
    // Predicated region
    $region14: #{tpu_custom_call.1} parent=1 // pred_check
      _
    $region15: #{tpu_custom_call.1} parent=1 // pred_check_branch
      %36 = sbr.rel (0) target = $region17
    $region16: #{tpu_custom_call.1} parent=1 // pred_region
      %37 = dma.done [#allocation4], 128
    $region17: #{tpu_custom_call.1} parent=1 // pred_fallthru
      _
    // Predicated region
    $region18: #{tpu_custom_call.1} parent=1 // pred_check
      _
    $region19: #{tpu_custom_call.1} parent=1 // pred_check_branch
      %39 = sbr.rel (0) target = $region21
    $region20: #{tpu_custom_call.1} parent=1 // pred_region
      %40 = dma.done [#allocation7], 512
    $region21: #{tpu_custom_call.1} parent=1 // pred_fallthru
      _
    %p41 = scmp.eq.s32.totalorder 0, 0
    // Predicated region
    $region22: #{tpu_custom_call.1} parent=1 // pred_check
      %p42 = pneg %p41
    $region23: #{tpu_custom_call.1} parent=1 // pred_check_branch
      %44 = sbr.rel (%p42) target = $region25
    $region24: #{tpu_custom_call.1} parent=1 // pred_region
      %45 = vst [vmem:[#allocation2] sm:$0xff] 0.0
    $region25: #{tpu_custom_call.1} parent=1 // pred_fallthru
      _
    %v46 = vld [vmem:[#allocation2] sm:$0xff]
    %v47 = vld [vmem:[#allocation3] sm:$0xff]
    %v48 = vld [vmem:[#allocation6] sm:$0xff]
    %v49 = vld [vmem:[#allocation6 + $0x8] sm:$0xff]
    %v50 = vld [vmem:[#allocation6 + $0x10] sm:$0xff]
    %v51 = vld [vmem:[#allocation6 + $0x18] sm:$0xff]
    %vm52 = vcmask 261120
    %v54 = vsel %vm52, %v47, 0
    %56 = vmatprep.subr.mxu0 0.0
    %57 = vmatpush1.msra.mxu0 0.0
    %58 = vmatprep.subr.mxu0 0.0
    %59 = vmatpush1.msra.mxu0 0.0
    %60 = vmatprep.subr.mxu0 0.0
    %61 = vmatpush1.msra.mxu0 0.0
    %62 = vmatprep.subr.mxu0 0.0
    %63 = vmatpush1.msra.mxu0 0.0
    %64 = vmatprep.subr.mxu0 0.0
    %65 = vmatpush1.msra.mxu0 0.0
    %66 = vmatprep.subr.mxu0 0.0
    %67 = vmatpush1.msra.mxu0 0.0
    %68 = vmatprep.subr.mxu0 0.0
    %69 = vmatpush1.msra.mxu0 0.0
    %70 = vmatprep.subr.mxu0 0.0
    %71 = vmatpush1.msra.mxu0 0.0
    %72 = vmatprep.subr.mxu0 0.0
    %73 = vmatpush1.msra.mxu0 0.0
    %74 = vmatprep.subr.mxu0 0.0
    %75 = vmatpush1.msra.mxu0 0.0
    %76 = vmatprep.subr.mxu0 0.0
    %77 = vmatpush1.msra.mxu0 0.0
    %78 = vmatprep.subr.mxu0 0.0
    %79 = vmatpush1.msra.mxu0 0.0
    %80 = vmatprep.subr.mxu0 0.0
    %81 = vmatpush1.msra.mxu0 %v51
    %82 = vmatprep.subr.mxu0 0.0
    %83 = vmatpush1.msra.mxu0 %v50
    %84 = vmatprep.subr.mxu0 0.0
    %85 = vmatpush1.msra.mxu0 %v49
    %86 = vmatprep.subr.mxu0 0.0
    %87 = vmatpush1.msra.mxu0 %v48
    %88 = vmatprep.subr.mxu0 0.0
    %89 = vmatpush2.msra.mxu0 0.0
    %90 = vmatprep.subr.mxu0 0.0
    %91 = vmatpush2.msra.mxu0 0.0
    %92 = vmatprep.subr.mxu0 0.0
    %93 = vmatpush2.msra.mxu0 0.0
    %94 = vmatprep.subr.mxu0 0.0
    %95 = vmatpush2.msra.mxu0 0.0
    %96 = vmatprep.subr.mxu0 0.0
    %97 = vmatpush2.msra.mxu0 0.0
    %98 = vmatprep.subr.mxu0 0.0
    %99 = vmatpush2.msra.mxu0 0.0
    %100 = vmatprep.subr.mxu0 0.0
    %101 = vmatpush2.msra.mxu0 0.0
    %102 = vmatprep.subr.mxu0 0.0
    %103 = vmatpush2.msra.mxu0 0.0
    %104 = vmatprep.subr.mxu0 0.0
    %105 = vmatpush2.msra.mxu0 0.0
    %106 = vmatprep.subr.mxu0 0.0
    %107 = vmatpush2.msra.mxu0 0.0
    %108 = vmatprep.subr.mxu0 0.0
    %109 = vmatpush2.msra.mxu0 0.0
    %110 = vmatprep.subr.mxu0 0.0
    %111 = vmatpush2.msra.mxu0 0.0
    %112 = vmatprep.subr.mxu0 0.0
    %113 = vmatpush2.msra.mxu0 0.0
    %114 = vmatprep.subr.mxu0 0.0
    %115 = vmatpush2.msra.mxu0 0.0
    %116 = vmatprep.subr.mxu0 0.0
    %117 = vmatpush2.msra.mxu0 0.0
    %118 = vmatprep.subr.mxu0 0.0
    %119 = vmatpush2.msra.mxu0 0.0
    %120 = vmatprep.mubr.f32.mxu0 0.0
    %121 = vmatmul.mubr.f32.gmra.mxu0 %v54
    %v122 = vpop.f32.mrf.mxu0
    %v123 = vadd.f32 0.0, %v122
    %v124 = vpop.f32.mrf.mxu0
    %125 = vdwg.mxu0
    %v126 = vadd.f32 %v46, %v123
    %127 = vst [vmem:[#allocation2] sm:$0xff] %v126
    // Predicated region
    $region26: #{tpu_custom_call.1} parent=1 // pred_check
      %p128 = pneg %p41
    $region27: #{tpu_custom_call.1} parent=1 // pred_check_branch
      %130 = sbr.rel (%p128) target = $region29
    $region28: #{tpu_custom_call.1} parent=1 // pred_region
      %v131 = vld [vmem:[#allocation2] sm:$0xff]
      %v132 = vrot.slane %v131, 4
      %v133 = vadd.f32 %v131, %v132
      %v134 = vrot.slane %v133, 2
      %v135 = vadd.f32 %v133, %v134
      %v136 = vrot.slane %v135, 1
      %v137 = vadd.f32 %v135, %v136
      %v138 = vrcp.pop 8.0
      %v139 = vmul.f32 %v137, %v138
      %v140 = vmul.f32 %v131, %v131
      %v141 = vrot.slane %v140, 4
      %v142 = vadd.f32 %v140, %v141
      %v143 = vrot.slane %v142, 2
      %v144 = vadd.f32 %v142, %v143
      %v145 = vrot.slane %v144, 1
      %v146 = vadd.f32 %v144, %v145
      %v147 = vmul.f32 %v146, %v138
      %v148 = vmul.f32 %v139, %v139
      %v149 = vsub.f32 %v147, %v148
      %v150 = vmax.f32 %v149, 0.0
      %v151 = vld [vmem:[%s2] sm:$0x3]
      %v152 = vadd.f32 %v150, 1e-05
      %v153 = vrsqrt.pop %v152
      %v154 = vmul.f32 %v151, %v153
      %v155 = vmul.f32 %v139, %v154
      %v157 = vrot.slane %v155, 7
      %v159 = vsub.f32 %v151, %v157
      %v160 = vlaneseq
      %v161 = vshrl.u32 %v160, 7
      %v162 = vsub.s32 0, %v161
      %v163 = vrot.slane %v154, %v162
      %v164 = vmul.f32 %v131, %v163
      %v165 = vlaneseq
      %v166 = vshrl.u32 %v165, 7
      %v167 = vsub.s32 1, %v166
      %v168 = vrot.slane %v159, %v167
      %v169 = vadd.f32 %v164, %v168
      %v170 = vmax.f32 %v169, 0.0
      %171 = vst [vmem:[#allocation8] sm:$0xff] %v170
    $region29: #{tpu_custom_call.1} parent=1 // pred_fallthru
      _
    // Predicated region
    $region30: #{tpu_custom_call.1} parent=1 // pred_check
      _
    $region31: #{tpu_custom_call.1} parent=1 // pred_check_branch
      %173 = sbr.rel (0) target = $region33
    $region32: #{tpu_custom_call.1} parent=1 // pred_region
      %s175 = ssub.s32 128, 128
      %176 = vsyncadd [#allocation5], %s175
      %s178 = sshll.u32 [#allocation8], 4
      %s179 = int_to_ptr.vmem [resolvable:$true] %s178
      %181 = dma.vmem_to_hbm [thread:$0]  %s179, 128, %s3, [#allocation5]
    $region33: #{tpu_custom_call.1} parent=1 // pred_fallthru
      _
    // Predicated region
    $region34: #{tpu_custom_call.1} parent=1 // pred_check
      _
    $region35: #{tpu_custom_call.1} parent=1 // pred_check_branch
      %183 = sbr.rel (0) target = $region37
    $region36: #{tpu_custom_call.1} parent=1 // pred_region
      %184 = dma.done [#allocation5], 128
    $region37: #{tpu_custom_call.1} parent=1 // pred_fallthru
      _
    %185 = vsyncpa [#allocation4], 1
    %186 = vsyncpa [#allocation7], 1
    %187 = vsyncpa [#allocation5], 1

// kernel: tpu_custom_call.1
$region0: #{tpu_custom_call.1}
  #allocation0 [shape = 'u32[]', space=smem, size = 0x4, offset = 0x4, fixed_abs, tag = 'smem constant byte address 0x4 - core index']
  #allocation1 [shape = 'u32[144,128]{1,0:T(1,128)}', space=vmem, size = 0x12000, scoped, tag = 'internal scratch']
  #allocation2 [shape = 'f32[8,128]{1,0:T(8,128)}', space=vmem, size = 0x1000, scoped, tag = 'scratch operand']
  %s0 = inlined_call_operand.hbm [shape: f32[8,32], index: 0, kind: input, shape index: {}]
  %s1 = inlined_call_operand.hbm [shape: f32[32,128], index: 1, kind: input, shape index: {}]
  %s2 = inlined_call_operand.vmem [shape: f32[2,128], index: 2, kind: input, shape index: {}]
  %s3 = inlined_call_operand.hbm [shape: f32[8,128], index: 3, kind: output, shape index: {}]
  %s4 = sld [smem:[#allocation0]]
  $region38: #{tpu_custom_call.1} parent=0
    _
  %s6 = ssub.s32 1, %s4
  %s7 = scalar_select 0, %s6, %s4
  $region1: #{tpu_custom_call.1} parent=0
    #allocation3 [shape = 'u8[4096]{0}', space=vmem, size = 0x1000, scoped, tag = 'input window, operand 0, single buffered']
    #allocation4 [shape = 's32[1]{0}', space=sflag, size = 0x4, scoped, tag = 'scoped memory for tpu_custom_call.1']
    #allocation5 [shape = 's32[1]{0}', space=sflag, size = 0x4, scoped, tag = 'scoped memory for tpu_custom_call.1']
    #allocation6 [shape = 'u8[16384]{0}', space=vmem, size = 0x4000, scoped, tag = 'input window, operand 1, single buffered']
    #allocation7 [shape = 's32[1]{0}', space=sflag, size = 0x4, scoped, tag = 'scoped memory for tpu_custom_call.1']
    #allocation8 [shape = 'u8[4096]{0}', space=vmem, size = 0x1000, scoped, tag = 'output window, operand 0, single buffered']
    %8 = vsyncpa [#allocation4], 0
    %9 = vsyncpa [#allocation7], 0
    %10 = vsyncpa [#allocation5], 0
    // Predicated region
    $region2: #{tpu_custom_call.1} parent=1 // pred_check
      _
    $region3: #{tpu_custom_call.1} parent=1 // pred_check_branch
      %12 = sbr.rel (0) target = $region5
    $region4: #{tpu_custom_call.1} parent=1 // pred_region
      %s14 = ssub.s32 128, 128
      %15 = vsyncadd [#allocation4], %s14
      %s17 = sshll.u32 [#allocation3], 4
      %s18 = int_to_ptr.vmem [resolvable:$true] %s17
      %20 = dma.hbm_to_vmem [thread:$0]  %s0, 128, %s18, [#allocation4]
    $region5: #{tpu_custom_call.1} parent=1 // pred_fallthru
      _
    // Predicated region
    $region6: #{tpu_custom_call.1} parent=1 // pred_check
      _
    $region7: #{tpu_custom_call.1} parent=1 // pred_check_branch
      %22 = sbr.rel (0) target = $region9
    $region8: #{tpu_custom_call.1} parent=1 // pred_region
      %s24 = ssub.s32 512, 512
      %25 = vsyncadd [#allocation7], %s24
      %s26 = sshll.u32 [#allocation6], 4
      %s27 = int_to_ptr.vmem [resolvable:$true] %s26
      %32 = dma.hbm_to_vmem [thread:$0]  %s1, 512, %s27, [#allocation7], 128, 128, 8
    $region9: #{tpu_custom_call.1} parent=1 // pred_fallthru
      _
    // Predicated region
    $region10: #{tpu_custom_call.1} parent=1 // pred_check
      _
    $region11: #{tpu_custom_call.1} parent=1 // pred_check_branch
      %34 = sbr.rel (0) target = $region13
    $region12: #{tpu_custom_call.1} parent=1 // pred_region
      _
    $region13: #{tpu_custom_call.1} parent=1 // pred_fallthru
      _
    // Predicated region
    $region14: #{tpu_custom_call.1} parent=1 // pred_check
      _
    $region15: #{tpu_custom_call.1} parent=1 // pred_check_branch
      %36 = sbr.rel (0) target = $region17
    $region16: #{tpu_custom_call.1} parent=1 // pred_region
      %37 = dma.done [#allocation4], 128
    $region17: #{tpu_custom_call.1} parent=1 // pred_fallthru
      _
    // Predicated region
    $region18: #{tpu_custom_call.1} parent=1 // pred_check
      _
    $region19: #{tpu_custom_call.1} parent=1 // pred_check_branch
      %39 = sbr.rel (0) target = $region21
    $region20: #{tpu_custom_call.1} parent=1 // pred_region
      %40 = dma.done [#allocation7], 512
    $region21: #{tpu_custom_call.1} parent=1 // pred_fallthru
      _
    %p41 = scmp.eq.s32.totalorder 0, 0
    // Predicated region
    $region22: #{tpu_custom_call.1} parent=1 // pred_check
      %p42 = pneg %p41
    $region23: #{tpu_custom_call.1} parent=1 // pred_check_branch
      %44 = sbr.rel (%p42) target = $region25
    $region24: #{tpu_custom_call.1} parent=1 // pred_region
      %45 = vst [vmem:[#allocation2] sm:$0xff] 0.0
    $region25: #{tpu_custom_call.1} parent=1 // pred_fallthru
      _
    %v46 = vld [vmem:[#allocation2] sm:$0xff]
    %v47 = vld [vmem:[#allocation3] sm:$0xff]
    %v48 = vld [vmem:[#allocation6] sm:$0xff]
    %v49 = vld [vmem:[#allocation6 + $0x8] sm:$0xff]
    %v50 = vld [vmem:[#allocation6 + $0x10] sm:$0xff]
    %v51 = vld [vmem:[#allocation6 + $0x18] sm:$0xff]
    %vm52 = vcmask 261120
    %v54 = vsel %vm52, %v47, 0
    %56 = vmatprep.subr.mxu0 0.0
    %57 = vmatpush1.msra.mxu0 0.0
    %58 = vmatprep.subr.mxu0 0.0
    %59 = vmatpush1.msra.mxu0 0.0
    %60 = vmatprep.subr.mxu0 0.0
    %61 = vmatpush1.msra.mxu0 0.0
    %62 = vmatprep.subr.mxu0 0.0
    %63 = vmatpush1.msra.mxu0 0.0
    %64 = vmatprep.subr.mxu0 0.0
    %65 = vmatpush1.msra.mxu0 0.0
    %66 = vmatprep.subr.mxu0 0.0
    %67 = vmatpush1.msra.mxu0 0.0
    %68 = vmatprep.subr.mxu0 0.0
    %69 = vmatpush1.msra.mxu0 0.0
    %70 = vmatprep.subr.mxu0 0.0
    %71 = vmatpush1.msra.mxu0 0.0
    %72 = vmatprep.subr.mxu0 0.0
    %73 = vmatpush1.msra.mxu0 0.0
    %74 = vmatprep.subr.mxu0 0.0
    %75 = vmatpush1.msra.mxu0 0.0
    %76 = vmatprep.subr.mxu0 0.0
    %77 = vmatpush1.msra.mxu0 0.0
    %78 = vmatprep.subr.mxu0 0.0
    %79 = vmatpush1.msra.mxu0 0.0
    %80 = vmatprep.subr.mxu0 0.0
    %81 = vmatpush1.msra.mxu0 %v51
    %82 = vmatprep.subr.mxu0 0.0
    %83 = vmatpush1.msra.mxu0 %v50
    %84 = vmatprep.subr.mxu0 0.0
    %85 = vmatpush1.msra.mxu0 %v49
    %86 = vmatprep.subr.mxu0 0.0
    %87 = vmatpush1.msra.mxu0 %v48
    %88 = vmatprep.subr.mxu0 0.0
    %89 = vmatpush2.msra.mxu0 0.0
    %90 = vmatprep.subr.mxu0 0.0
    %91 = vmatpush2.msra.mxu0 0.0
    %92 = vmatprep.subr.mxu0 0.0
    %93 = vmatpush2.msra.mxu0 0.0
    %94 = vmatprep.subr.mxu0 0.0
    %95 = vmatpush2.msra.mxu0 0.0
    %96 = vmatprep.subr.mxu0 0.0
    %97 = vmatpush2.msra.mxu0 0.0
    %98 = vmatprep.subr.mxu0 0.0
    %99 = vmatpush2.msra.mxu0 0.0
    %100 = vmatprep.subr.mxu0 0.0
    %101 = vmatpush2.msra.mxu0 0.0
    %102 = vmatprep.subr.mxu0 0.0
    %103 = vmatpush2.msra.mxu0 0.0
    %104 = vmatprep.subr.mxu0 0.0
    %105 = vmatpush2.msra.mxu0 0.0
    %106 = vmatprep.subr.mxu0 0.0
    %107 = vmatpush2.msra.mxu0 0.0
    %108 = vmatprep.subr.mxu0 0.0
    %109 = vmatpush2.msra.mxu0 0.0
    %110 = vmatprep.subr.mxu0 0.0
    %111 = vmatpush2.msra.mxu0 0.0
    %112 = vmatprep.subr.mxu0 0.0
    %113 = vmatpush2.msra.mxu0 0.0
    %114 = vmatprep.subr.mxu0 0.0
    %115 = vmatpush2.msra.mxu0 0.0
    %116 = vmatprep.subr.mxu0 0.0
    %117 = vmatpush2.msra.mxu0 0.0
    %118 = vmatprep.subr.mxu0 0.0
    %119 = vmatpush2.msra.mxu0 0.0
    %120 = vmatprep.mubr.f32.mxu0 0.0
    %121 = vmatmul.mubr.f32.gmra.mxu0 %v54
    %v122 = vpop.f32.mrf.mxu0
    %v123 = vadd.f32 0.0, %v122
    %v124 = vpop.f32.mrf.mxu0
    %125 = vdwg.mxu0
    %v126 = vadd.f32 %v46, %v123
    %127 = vst [vmem:[#allocation2] sm:$0xff] %v126
    // Predicated region
    $region26: #{tpu_custom_call.1} parent=1 // pred_check
      %p128 = pneg %p41
    $region27: #{tpu_custom_call.1} parent=1 // pred_check_branch
      %130 = sbr.rel (%p128) target = $region29
    $region28: #{tpu_custom_call.1} parent=1 // pred_region
      %v131 = vld [vmem:[#allocation2] sm:$0xff]
      %v132 = vrot.slane %v131, 4
      %v133 = vadd.f32 %v131, %v132
      %v134 = vrot.slane %v133, 2
      %v135 = vadd.f32 %v133, %v134
      %v136 = vrot.slane %v135, 1
      %v137 = vadd.f32 %v135, %v136
      %v138 = vrcp.pop 8.0
      %v139 = vmul.f32 %v137, %v138
      %v140 = vmul.f32 %v131, %v131
      %v141 = vrot.slane %v140, 4
      %v142 = vadd.f32 %v140, %v141
      %v143 = vrot.slane %v142, 2
      %v144 = vadd.f32 %v142, %v143
      %v145 = vrot.slane %v144, 1
      %v146 = vadd.f32 %v144, %v145
      %v147 = vmul.f32 %v146, %v138
      %v148 = vmul.f32 %v139, %v139
      %v149 = vsub.f32 %v147, %v148
      %v150 = vmax.f32 %v149, 0.0
      %v151 = vld [vmem:[%s2] sm:$0x3]
      %v152 = vadd.f32 %v150, 1e-05
      %v153 = vrsqrt.pop %v152
      %v154 = vmul.f32 %v151, %v153
      %v155 = vmul.f32 %v139, %v154
      %v157 = vrot.slane %v155, 7
      %v159 = vsub.f32 %v151, %v157
      %v160 = vlaneseq
      %v161 = vshrl.u32 %v160, 7
      %v162 = vsub.s32 0, %v161
      %v163 = vrot.slane %v154, %v162
      %v164 = vmul.f32 %v131, %v163
      %v165 = vlaneseq
      %v166 = vshrl.u32 %v165, 7
      %v167 = vsub.s32 1, %v166
      %v168 = vrot.slane %v159, %v167
      %v169 = vadd.f32 %v164, %v168
      %v170 = vmax.f32 %v169, 0.0
      %171 = vst [vmem:[#allocation8] sm:$0xff] %v170
    $region29: #{tpu_custom_call.1} parent=1 // pred_fallthru
      _
    // Predicated region
    $region30: #{tpu_custom_call.1} parent=1 // pred_check
      _
    $region31: #{tpu_custom_call.1} parent=1 // pred_check_branch
      %173 = sbr.rel (0) target = $region33
    $region32: #{tpu_custom_call.1} parent=1 // pred_region
      %s175 = ssub.s32 128, 128
      %176 = vsyncadd [#allocation5], %s175
      %s178 = sshll.u32 [#allocation8], 4
      %s179 = int_to_ptr.vmem [resolvable:$true] %s178
      %181 = dma.vmem_to_hbm [thread:$0]  %s179, 128, %s3, [#allocation5]
    $region33: #{tpu_custom_call.1} parent=1 // pred_fallthru
      _
    // Predicated region
    $region34: #{tpu_custom_call.1} parent=1 // pred_check
      _
    $region35: #{tpu_custom_call.1} parent=1 // pred_check_branch
      %183 = sbr.rel (0) target = $region37
    $region36: #{tpu_custom_call.1} parent=1 // pred_region
      %184 = dma.done [#allocation5], 128
    $region37: #{tpu_custom_call.1} parent=1 // pred_fallthru
      _
    %185 = vsyncpa [#allocation4], 1
    %186 = vsyncpa [#allocation7], 1
    %187 = vsyncpa [#allocation5], 1

</llo_original>
